<compile_context>
chip_gen: v7x
topology: tpu7x:2x2x1
jax: 0.10.0
libtpu: 0.0.40
codegen_flags: <defaults>
</compile_context>

<pallas_src>
import jax
import jax.numpy as jnp
from jax.experimental import pallas as pl
from jax.experimental.pallas import tpu as pltpu


def _round_up(v, m):
    return ((v + m - 1) // m) * m


def _elu(z):
    # F.elu with alpha=1:  z if z > 0 else exp(z) - 1  (single exp, clamped arg)
    return jnp.where(z > 0.0, z, jnp.exp(jnp.minimum(z, 0.0)) - 1.0)


def _make_kernel(kind, use_fc, use_elu_fc, use_extra):
    """kind in {'mean','max'}; flags select the post-aggregation transform."""

    def kernel(*refs):
        it = iter(refs)
        a_ref = next(it)      # (TN, TK) bf16  adjacency tile (dst rows x src cols)
        xs_ref = next(it)     # (TK, Fp) f32   source-feature chunk
        deg_ref = next(it)    # (TN, 1)  f32   in-degree of this dst tile (precomputed)
        w_ref = next(it) if use_fc else None
        b_ref = next(it) if use_fc else None
        xd_ref = next(it) if use_extra else None
        w2_ref = next(it) if use_extra else None
        b2_ref = next(it) if use_extra else None
        o_ref = next(it)      # (TN, Op) f32   output tile
        acc_ref = next(it)    # (TN, Fp) f32   accumulator / running max scratch

        k = pl.program_id(1)
        nk = pl.num_programs(1)

        @pl.when(k == 0)
        def _init():
            if kind == "mean":
                acc_ref[...] = jnp.zeros_like(acc_ref)
            else:
                acc_ref[...] = jnp.full_like(acc_ref, -jnp.inf)

        if kind == "mean":
            a = a_ref[...].astype(jnp.float32)
            acc_ref[...] += jnp.dot(a, xs_ref[...],
                                    preferred_element_type=jnp.float32)
        else:
            # chunked running max: only a (TN, TK, Fp) live set per step
            a = a_ref[...]
            masked = jnp.where(a[:, :, None] > 0,
                               xs_ref[...][None, :, :], -jnp.inf)
            acc_ref[...] = jnp.maximum(acc_ref[...], jnp.max(masked, axis=1))

        @pl.when(k == nk - 1)
        def _finalize():
            h = acc_ref[...]
            deg = deg_ref[...]
            if kind == "mean":
                d = jnp.maximum(deg, 1.0)
                r = pl.reciprocal(d, approx=True)
                r = r * (2.0 - d * r)          # one Newton step -> ~f32 accuracy
                h = h * r
            else:
                h = jnp.where(deg > 0.0, h, 0.0)   # DGL: no in-edges -> zeros
            if use_fc:
                h = jnp.dot(h, w_ref[...],
                            preferred_element_type=jnp.float32) + b_ref[...]
                if use_elu_fc:
                    h = _elu(h)
            if use_extra:
                z = jnp.dot(xd_ref[...], w2_ref[...],
                            preferred_element_type=jnp.float32) + b2_ref[...]
                h = h + _elu(z)
            o_ref[...] = h.astype(o_ref.dtype)

    return kernel


def attribute_aggregate(adj, x, params, aggr, *, tile_n=None, tile_k=None):
    """Pallas forward for the max/mean family of AttributeAggregate."""
    assert aggr in ("mean", "max", "mean_1", "max_1",
                    "mean_2", "max_2", "mean_3", "max_3")
    kind = "mean" if aggr.startswith("mean") else "max"
    use_fc = not aggr.endswith("_1")
    use_elu_fc = aggr in ("mean", "max", "mean_3", "max_3")
    use_extra = aggr.endswith("_3")

    N, F = x.shape
    out_dim = params["W"].shape[1] if use_fc else F

    # ---- tile selection (per-mode defaults; sized to stay well inside v7x VMEM) ----
    if tile_n is None:
        tile_n = min(256 if kind == "mean" else 128, _round_up(N, 8))
    if tile_k is None:
        tile_k = min(512 if kind == "mean" else 128, _round_up(N, 128))
    tile_n = _round_up(tile_n, 8)
    tile_k = _round_up(tile_k, 128)

    rn = _round_up(N, tile_n)      # padded dst count
    rk = _round_up(N, tile_k)      # padded src count
    fp = _round_up(F, 128)         # lane-dense feature dim
    op = _round_up(out_dim, 128)   # lane-dense output dim

    # ---- explicit zero padding so every block edge is well-defined ----
    adj_p = jnp.zeros((rn, rk), jnp.float32).at[:N, :N].set(adj)
    deg_p = jnp.sum(adj_p, axis=1, keepdims=True)      # degree computed once, not per chunk
    adj_p = adj_p.astype(jnp.bfloat16)                 # 0/1 values -> lossless bf16
    x_p = jnp.zeros((rk, fp), jnp.float32).at[:N, :F].set(x)

    operands = [adj_p, x_p, deg_p]
    in_specs = [
        pl.BlockSpec((tile_n, tile_k), lambda i, k: (i, k)),   # A   dst-tile x src-chunk
        pl.BlockSpec((tile_k, fp), lambda i, k: (k, 0)),       # x   src-chunk
        pl.BlockSpec((tile_n, 1), lambda i, k: (i, 0)),        # deg dst-tile
    ]
    if use_fc:
        Wp = jnp.zeros((fp, op), jnp.float32).at[:F, :out_dim].set(params["W"])
        bp = jnp.zeros((1, op), jnp.float32).at[:, :out_dim].set(params["b"])
        operands += [Wp, bp]
        in_specs += [pl.BlockSpec((fp, op), lambda i, k: (0, 0)),
                     pl.BlockSpec((1, op), lambda i, k: (0, 0))]
    if use_extra:
        xd_p = jnp.zeros((rn, fp), jnp.float32).at[:N, :F].set(x)
        W2p = jnp.zeros((fp, op), jnp.float32).at[:F, :out_dim].set(params["W2"])
        b2p = jnp.zeros((1, op), jnp.float32).at[:, :out_dim].set(params["b2"])
        operands += [xd_p, W2p, b2p]
        in_specs += [pl.BlockSpec((tile_n, fp), lambda i, k: (i, 0)),
                     pl.BlockSpec((fp, op), lambda i, k: (0, 0)),
                     pl.BlockSpec((1, op), lambda i, k: (0, 0))]

    kernel = _make_kernel(kind, use_fc, use_elu_fc, use_extra)
    grid = (rn // tile_n, rk // tile_k)

    out_p = pl.pallas_call(
        kernel,
        out_shape=jax.ShapeDtypeStruct((rn, op), jnp.float32),
        grid_spec=pltpu.PrefetchScalarGridSpec(
            num_scalar_prefetch=0,
            grid=grid,
            in_specs=in_specs,
            out_specs=pl.BlockSpec((tile_n, op), lambda i, k: (i, 0)),
            scratch_shapes=[pltpu.VMEM((tile_n, fp), jnp.float32)],
        ),
        compiler_params=pltpu.CompilerParams(
            dimension_semantics=("parallel", "arbitrary"),
            vmem_limit_bytes=48 * 1024 * 1024),   # fits v7x's 64 MiB physical VMEM
    )(*operands)

    return out_p[:N, :out_dim]


def _reference(adj, x, params, aggr):
    kind = "mean" if aggr.startswith("mean") else "max"
    use_fc = not aggr.endswith("_1")
    use_elu_fc = aggr in ("mean", "max", "mean_3", "max_3")
    use_extra = aggr.endswith("_3")
    deg = jnp.sum(adj, axis=1, keepdims=True)
    if kind == "mean":
        h = (adj @ x) / jnp.maximum(deg, 1.0)
    else:
        masked = jnp.where(adj[:, :, None] > 0.0, x[None, :, :], -jnp.inf)
        h = jnp.where(deg > 0.0, jnp.max(masked, axis=1), 0.0)
    if use_fc:
        h = h @ params["W"] + params["b"]
        if use_elu_fc:
            h = _elu(h)
    if use_extra:
        h = h + _elu(x @ params["W2"] + params["b2"])
    return h


def _init_params(key, in_dim, out_dim):
    # Deterministic nn.Linear-style init: U(-1/sqrt(fan_in), 1/sqrt(fan_in)).
    k1, k2, k3, k4 = jax.random.split(key, 4)
    s1 = 1.0 / jnp.sqrt(in_dim)
    s2 = 1.0 / jnp.sqrt(out_dim)
    return {
        "W":  jax.random.uniform(k1, (in_dim, out_dim), jnp.float32, -s1, s1),
        "b":  jax.random.uniform(k2, (1, out_dim), jnp.float32, -s1, s1),
        "W2": jax.random.uniform(k3, (in_dim, out_dim), jnp.float32, -s2, s2),
        "b2": jax.random.uniform(k4, (1, out_dim), jnp.float32, -s2, s2),
    }


if __name__ == "__main__":
    # Small but multi-tile demo: N is not a multiple of the tiles (exercises padding),
    # grid is (3 dst tiles x 2 src chunks) with tile_n=64, tile_k=128.
    N, IN_DIM, OUT_DIM = 160, 32, 32   # _3 modes require in_dim == out_dim (as in the module)

    key = jax.random.PRNGKey(0)
    k_adj, k_x, k_p = jax.random.split(key, 3)

    # Random directed graph, A[dst, src] = 1.0 for edge src -> dst, no self-loops.
    adj = (jax.random.uniform(k_adj, (N, N)) < 0.15).astype(jnp.float32)
    adj = adj * (1.0 - jnp.eye(N, dtype=jnp.float32))
    x = jax.random.normal(k_x, (N, IN_DIM), dtype=jnp.float32)
    params = _init_params(k_p, IN_DIM, OUT_DIM)

    ok = True
    for aggr in ("mean", "max", "mean_1", "max_1",
                 "mean_2", "max_2", "mean_3", "max_3"):
        out = attribute_aggregate(adj, x, params, aggr, tile_n=64, tile_k=128)
        out = jax.block_until_ready(out)
        ref = _reference(adj, x, params, aggr)
        if not jnp.allclose(out, ref, atol=1e-4, rtol=1e-4):
            ok = False
            err = float(jnp.max(jnp.abs(out - ref)))
            print(f"MISMATCH in aggr={aggr}: max abs err = {err}")

    if ok:
        print("KERNEL_OK")
</pallas_src>

<mosaic_0001>
module attributes {stable_mosaic.version = 11 : i64} {
  func.func @kernel(%arg0: i32, %arg1: i32, %arg2: memref<64x128xbf16, #tpu.memory_space<vmem>>, %arg3: memref<128x128xf32, #tpu.memory_space<vmem>>, %arg4: memref<64x1xf32, #tpu.memory_space<vmem>>, %arg5: memref<128x128xf32, #tpu.memory_space<vmem>>, %arg6: memref<1x128xf32, #tpu.memory_space<vmem>>, %arg7: memref<64x128xf32, #tpu.memory_space<vmem>>, %arg8: memref<64x128xf32, #tpu.memory_space<vmem>>) attributes {dimension_semantics = [#tpu.dimension_semantics<parallel>, #tpu.dimension_semantics<arbitrary>], iteration_bounds = array<i64: 3, 2>, scalar_prefetch = 0 : i64, scratch_operands = 1 : i64, tpu.core_type = #tpu.core_type<tc>, window_params = [{transform_indices = @transform_0, window_bounds = array<i64: 64, 128>}, {transform_indices = @transform_1, window_bounds = array<i64: 128, 128>}, {transform_indices = @transform_2, window_bounds = array<i64: 64, 1>}, {pipeline_mode = #tpu.pipeline_mode<synchronous>, transform_indices = @transform_3, window_bounds = array<i64: 128, 128>}, {pipeline_mode = #tpu.pipeline_mode<synchronous>, transform_indices = @transform_4, window_bounds = array<i64: 1, 128>}, {transform_indices = @transform_5, window_bounds = array<i64: 64, 128>}]} {
    %c0_i32 = arith.constant 0 : i32
    %0 = arith.cmpi eq, %arg1, %c0_i32 : i32
    %1 = arith.extui %0 : i1 to i32
    %c0_i32_0 = arith.constant 0 : i32
    %2 = arith.cmpi ne, %1, %c0_i32_0 : i32
    scf.if %2 {
      %cst_9 = arith.constant 0.000000e+00 : f32
      %13 = vector.broadcast %cst_9 : f32 to vector<64x128xf32>
      %c0_10 = arith.constant 0 : index
      %c0_11 = arith.constant 0 : index
      %14 = vector.load %arg8[%c0_10, %c0_11] : memref<64x128xf32, #tpu.memory_space<vmem>>, vector<64x128xf32>
      tpu.vector_store %arg8[%c0_10, %c0_11], %13 {strides = array<i32>} : memref<64x128xf32, #tpu.memory_space<vmem>>, vector<64x128xf32>,
    } else {
    }
    %c0 = arith.constant 0 : index
    %c0_1 = arith.constant 0 : index
    %3 = vector.load %arg2[%c0, %c0_1] : memref<64x128xbf16, #tpu.memory_space<vmem>>, vector<64x128xbf16>
    %4 = arith.extf %3 : vector<64x128xbf16> to vector<64x128xf32>
    %c0_2 = arith.constant 0 : index
    %c0_3 = arith.constant 0 : index
    %5 = vector.load %arg8[%c0_2, %c0_3] : memref<64x128xf32, #tpu.memory_space<vmem>>, vector<64x128xf32>
    %c0_4 = arith.constant 0 : index
    %c0_5 = arith.constant 0 : index
    %6 = vector.load %arg3[%c0_4, %c0_5] : memref<128x128xf32, #tpu.memory_space<vmem>>, vector<128x128xf32>
    %cst = arith.constant dense<0.000000e+00> : vector<64x128xf32>
    %7 = tpu.matmul %4, %6, %cst {dimension_numbers = #tpu.dot_dimension_numbers<[1], [0], [0], [1], [0, 0, 1, 1], [], []>} : vector<64x128xf32>, vector<128x128xf32>, vector<64x128xf32> -> vector<64x128xf32>
    %8 = arith.addf %5, %7 : vector<64x128xf32>
    %c0_6 = arith.constant 0 : index
    %c0_7 = arith.constant 0 : index
    %9 = vector.load %arg8[%c0_6, %c0_7] : memref<64x128xf32, #tpu.memory_space<vmem>>, vector<64x128xf32>
    tpu.vector_store %arg8[%c0_6, %c0_7], %8 {strides = array<i32>} : memref<64x128xf32, #tpu.memory_space<vmem>>, vector<64x128xf32>,
    %c1_i32 = arith.constant 1 : i32
    %10 = arith.cmpi eq, %arg1, %c1_i32 : i32
    %11 = arith.extui %10 : i1 to i32
    %c0_i32_8 = arith.constant 0 : i32
    %12 = arith.cmpi ne, %11, %c0_i32_8 : i32
    scf.if %12 {
      %c0_9 = arith.constant 0 : index
      %c0_10 = arith.constant 0 : index
      %13 = vector.load %arg8[%c0_9, %c0_10] : memref<64x128xf32, #tpu.memory_space<vmem>>, vector<64x128xf32>
      %c0_11 = arith.constant 0 : index
      %c0_12 = arith.constant 0 : index
      %14 = vector.load %arg4[%c0_11, %c0_12] : memref<64x1xf32, #tpu.memory_space<vmem>>, vector<64x1xf32>
      %cst_13 = arith.constant 1.000000e+00 : f32
      %15 = vector.broadcast %cst_13 : f32 to vector<64x1xf32>
      %16 = arith.maximumf %14, %15 : vector<64x1xf32>
      %17 = tpu.reciprocal %16 {approx = true} : vector<64x1xf32> -> vector<64x1xf32>
      %18 = arith.mulf %16, %17 : vector<64x1xf32>
      %cst_14 = arith.constant 2.000000e+00 : f32
      %19 = vector.broadcast %cst_14 : f32 to vector<64x1xf32>
      %20 = arith.subf %19, %18 : vector<64x1xf32>
      %21 = arith.mulf %17, %20 : vector<64x1xf32>
      %22 = vector.broadcast %21 : vector<64x1xf32> to vector<64x128xf32>
      %23 = arith.mulf %13, %22 : vector<64x128xf32>
      %c0_15 = arith.constant 0 : index
      %c0_16 = arith.constant 0 : index
      %24 = vector.load %arg5[%c0_15, %c0_16] : memref<128x128xf32, #tpu.memory_space<vmem>>, vector<128x128xf32>
      %cst_17 = arith.constant dense<0.000000e+00> : vector<64x128xf32>
      %25 = tpu.matmul %23, %24, %cst_17 {dimension_numbers = #tpu.dot_dimension_numbers<[1], [0], [0], [1], [0, 0, 1, 1], [], []>} : vector<64x128xf32>, vector<128x128xf32>, vector<64x128xf32> -> vector<64x128xf32>
      %c0_18 = arith.constant 0 : index
      %c0_19 = arith.constant 0 : index
      %26 = vector.load %arg6[%c0_18, %c0_19] : memref<1x128xf32, #tpu.memory_space<vmem>>, vector<1x128xf32>
      %27 = vector.broadcast %26 : vector<1x128xf32> to vector<64x128xf32>
      %28 = arith.addf %25, %27 : vector<64x128xf32>
      %cst_20 = arith.constant 0.000000e+00 : f32
      %29 = vector.broadcast %cst_20 : f32 to vector<64x128xf32>
      %30 = arith.cmpf ogt, %28, %29 : vector<64x128xf32>
      %cst_21 = arith.constant 0.000000e+00 : f32
      %31 = vector.broadcast %cst_21 : f32 to vector<64x128xf32>
      %32 = arith.minimumf %28, %31 : vector<64x128xf32>
      %33 = math.exp %32 : vector<64x128xf32>
      %cst_22 = arith.constant 1.000000e+00 : f32
      %34 = vector.broadcast %cst_22 : f32 to vector<64x128xf32>
      %35 = arith.subf %33, %34 : vector<64x128xf32>
      %36 = arith.select %30, %28, %35 : vector<64x128xi1>, vector<64x128xf32>
      %c0_23 = arith.constant 0 : index
      %c0_24 = arith.constant 0 : index
      %37 = vector.load %arg7[%c0_23, %c0_24] : memref<64x128xf32, #tpu.memory_space<vmem>>, vector<64x128xf32>
      tpu.vector_store %arg7[%c0_23, %c0_24], %36 {strides = array<i32>} : memref<64x128xf32, #tpu.memory_space<vmem>>, vector<64x128xf32>,
    } else {
    }
    return
  }
  func.func @transform_0(%arg0: i32, %arg1: i32) -> (i32, i32) {
    %c0_i32 = arith.constant 0 : i32
    return %arg0, %arg1 : i32, i32
  }
  func.func @transform_1(%arg0: i32, %arg1: i32) -> (i32, i32) {
    %c0_i32 = arith.constant 0 : i32
    %c0_i32_0 = arith.constant 0 : i32
    return %arg1, %c0_i32 : i32, i32
  }
  func.func @transform_2(%arg0: i32, %arg1: i32) -> (i32, i32) {
    %c0_i32 = arith.constant 0 : i32
    %c0_i32_0 = arith.constant 0 : i32
    return %arg0, %c0_i32 : i32, i32
  }
  func.func @transform_3(%arg0: i32, %arg1: i32) -> (i32, i32) {
    %c0_i32 = arith.constant 0 : i32
    %c0_i32_0 = arith.constant 0 : i32
    %c0_i32_1 = arith.constant 0 : i32
    return %c0_i32, %c0_i32_0 : i32, i32
  }
  func.func @transform_4(%arg0: i32, %arg1: i32) -> (i32, i32) {
    %c0_i32 = arith.constant 0 : i32
    %c0_i32_0 = arith.constant 0 : i32
    %c0_i32_1 = arith.constant 0 : i32
    return %c0_i32, %c0_i32_0 : i32, i32
  }
  func.func @transform_5(%arg0: i32, %arg1: i32) -> (i32, i32) {
    %c0_i32 = arith.constant 0 : i32
    %c0_i32_0 = arith.constant 0 : i32
    return %arg0, %c0_i32 : i32, i32
  }
}

</mosaic_0001>

<llo_original>
// kernel: tpu_custom_call.1
$region0: #{tpu_custom_call.1}
  #allocation0 [shape = 'u32[]', space=smem, size = 0x4, offset = 0x4, fixed_abs, tag = 'smem constant byte address 0x4 - core index']
  #allocation1 [shape = 'u32[144,128]{1,0:T(1,128)}', space=vmem, size = 0x12000, scoped, tag = 'internal scratch']
  #allocation2 [shape = 'f32[64,128]{1,0:T(8,128)}', space=vmem, size = 0x8000, scoped, tag = 'scratch operand']
  %s0 = inlined_call_operand.vmem [shape: bf16[192,256], index: 0, kind: input, shape index: {}]
  %s1 = inlined_call_operand.hbm [shape: f32[256,128], index: 1, kind: input, shape index: {}]
  %s2 = inlined_call_operand.vmem [shape: f32[192,1], index: 2, kind: input, shape index: {}]
  %s3 = inlined_call_operand.hbm [shape: f32[128,128], index: 3, kind: input, shape index: {}]
  %s4 = inlined_call_operand.vmem [shape: f32[1,128], index: 4, kind: input, shape index: {}]
  %s5 = inlined_call_operand.hbm [shape: f32[192,128], index: 5, kind: output, shape index: {}]
  %s6 = sld [smem:[#allocation0]]
  $region110: #{tpu_custom_call.1} parent=0
    _
  %s8 = ssub.s32 1, %s6
  %s9 = scalar_select 0, %s8, %s6
  $region1: #{tpu_custom_call.1} parent=0
    #allocation3 [shape = 'u8[32768]{0}', space=vmem, size = 0x8000, scoped, tag = 'input window, operand 0']
    #allocation4 [shape = 'u8[131072]{0}', space=vmem, size = 0x20000, scoped, tag = 'input window, operand 1']
    #allocation5 [shape = 's32[2]{0}', space=sflag, size = 0x8, scoped, tag = 'scoped memory for tpu_custom_call.1']
    #allocation6 [shape = 's32[2]{0}', space=sflag, size = 0x8, scoped, tag = 'scoped memory for tpu_custom_call.1']
    #allocation7 [shape = 'u8[65536]{0}', space=vmem, size = 0x10000, scoped, tag = 'input window, operand 3, single buffered']
    #allocation8 [shape = 's32[1]{0}', space=sflag, size = 0x4, scoped, tag = 'scoped memory for tpu_custom_call.1']
    #allocation9 [shape = 'u8[65536]{0}', space=vmem, size = 0x10000, scoped, tag = 'output window, operand 0']
    %10 = vsyncpa [#allocation5], 0
    %s11 = scalar_lea.sflag [#allocation5], 1
    %12 = vsyncpa %s11, 0
    %13 = vsyncpa [#allocation8], 0
    %14 = vsyncpa [#allocation6], 0
    %s15 = scalar_lea.sflag [#allocation6], 1
    %16 = vsyncpa %s15, 0
    loop: start=0, step=1, limit=8
    $region2: #{tpu_custom_call.1} parent=1 // loop_pre_header
      _
    $region3: #{tpu_custom_call.1} parent=1 // loop_header
      %s18 = sphi 0, %s22
      %p19 = scmp.ge.s32.totalorder %s18, 8
      %s25 = sphi 0, %s37
      %s26 = sphi 0, %s33
      %s27 = sphi 0, %s25
      %s28 = sphi 0, %s26
      %s29 = sphi 0, %s27
      %s30 = sphi 0, %s28
      %s42 = sphi 0, %s44
      %s45 = sphi 0, %s42
      %s46 = sphi 0, %s45
      %s62 = sphi 0, %s46
      %s68 = sphi 0, %s70
      %s71 = sphi 0, %s68
      %s72 = sphi 0, %s71
      %s88 = sphi 0, %s72
      %s94 = sphi 0, %s96
      %s97 = sphi 0, %s94
      %s98 = sphi 0, %s97
      %s114 = sphi 0, %s98
      %s118 = sphi 0, %s118
      %s120 = sphi 0, %s118
      %s121 = sphi 0, %s120
      %s135 = sphi 0, %s121
      %s139 = sphi 0, %s139
      %s141 = sphi 0, %s139
      %s142 = sphi 0, %s141
      %s156 = sphi 0, %s142
      %s162 = sphi 0, %s164
      %s165 = sphi 0, %s162
      %s166 = sphi 0, %s165
      %s182 = sphi 0, %s166
    $region4: #{tpu_custom_call.1} parent=1 // loop_header_branch
      %21 = sbr.rel (%p19) target = $region8
    $region5: #{tpu_custom_call.1} parent=1 // loop_body
      %s23 = ssub.s32 %s18, 1
      %s24 = ssub.s32 %s18, 2
      %s31 = sadd.s32 1, %s26
      %p32 = scmp.ge.s32.totalorder %s31, 2
      %s33 = scalar_select %p32, 0, %s31
      %s34 = sadd.s32 1, %s25
      %s35 = scalar_select %p32, %s34, %s25
      %p36 = scmp.ge.s32.totalorder %s35, 3
      %s37 = scalar_select %p36, 0, %s35
      %s38 = ssub.s32 %s25, %s37
      %s39 = ssub.s32 %s26, %s33
      %s40 = sor.u32 %s38, %s39
      %p41 = scmp.eq.s32.totalorder %s40, 0
      %s43 = sadd.s32 %s42, 1
      %s44 = scalar_select %p41, %s42, %s43
      %p47 = pneg %p41
      %p48 = scmp.eq.s32.totalorder %s18, 5
      %p49 = por %p47, %p48
      %p50 = scmp.ne.s32.totalorder %s42, %s45
      %p51 = scmp.eq.s32.totalorder %s18, 0
      %p52 = por %p50, %p51
      %p53 = scmp.ne.s32.totalorder %s42, %s45
      %p54 = scmp.eq.s32.totalorder %s23, 5
      %p55 = por %p53, %p54
      %p56 = scmp.ne.s32.totalorder %s45, %s46
      %p57 = scmp.eq.s32.totalorder %s23, 0
      %p58 = por %p56, %p57
      %p59 = scmp.ne.s32.totalorder %s45, %s46
      %p60 = scmp.eq.s32.totalorder %s24, 5
      %p61 = por %p59, %p60
      %p63 = scmp.ne.s32.totalorder %s46, %s62
      %p64 = scmp.eq.s32.totalorder %s24, 0
      %p65 = por %p63, %p64
      %s66 = ssub.s32 %s26, %s33
      %p67 = scmp.eq.s32.totalorder %s66, 0
      %s69 = sadd.s32 %s68, 1
      %s70 = scalar_select %p67, %s68, %s69
      %p73 = pneg %p67
      %p74 = scmp.eq.s32.totalorder %s18, 5
      %p75 = por %p73, %p74
      %p76 = scmp.ne.s32.totalorder %s68, %s71
      %p77 = scmp.eq.s32.totalorder %s18, 0
      %p78 = por %p76, %p77
      %p79 = scmp.ne.s32.totalorder %s68, %s71
      %p80 = scmp.eq.s32.totalorder %s23, 5
      %p81 = por %p79, %p80
      %p82 = scmp.ne.s32.totalorder %s71, %s72
      %p83 = scmp.eq.s32.totalorder %s23, 0
      %p84 = por %p82, %p83
      %p85 = scmp.ne.s32.totalorder %s71, %s72
      %p86 = scmp.eq.s32.totalorder %s24, 5
      %p87 = por %p85, %p86
      %p89 = scmp.ne.s32.totalorder %s72, %s88
      %p90 = scmp.eq.s32.totalorder %s24, 0
      %p91 = por %p89, %p90
      %s92 = ssub.s32 %s25, %s37
      %p93 = scmp.eq.s32.totalorder %s92, 0
      %s95 = sadd.s32 %s94, 1
      %s96 = scalar_select %p93, %s94, %s95
      %p99 = pneg %p93
      %p100 = scmp.eq.s32.totalorder %s18, 5
      %p101 = por %p99, %p100
      %p102 = scmp.ne.s32.totalorder %s94, %s97
      %p103 = scmp.eq.s32.totalorder %s18, 0
      %p104 = por %p102, %p103
      %p105 = scmp.ne.s32.totalorder %s94, %s97
      %p106 = scmp.eq.s32.totalorder %s23, 5
      %p107 = por %p105, %p106
      %p108 = scmp.ne.s32.totalorder %s97, %s98
      %p109 = scmp.eq.s32.totalorder %s23, 0
      %p110 = por %p108, %p109
      %p111 = scmp.ne.s32.totalorder %s97, %s98
      %p112 = scmp.eq.s32.totalorder %s24, 5
      %p113 = por %p111, %p112
      %p115 = scmp.ne.s32.totalorder %s98, %s114
      %p116 = scmp.eq.s32.totalorder %s24, 0
      %p117 = por %p115, %p116
      %s119 = sadd.s32 %s118, 1
      %p122 = scmp.eq.s32.totalorder %s18, 5
      %p123 = scmp.ne.s32.totalorder %s118, %s120
      %p124 = scmp.eq.s32.totalorder %s18, 0
      %p125 = por %p123, %p124
      %p126 = scmp.ne.s32.totalorder %s118, %s120
      %p127 = scmp.eq.s32.totalorder %s23, 5
      %p128 = por %p126, %p127
      %p129 = scmp.ne.s32.totalorder %s120, %s121
      %p130 = scmp.eq.s32.totalorder %s23, 0
      %p131 = por %p129, %p130
      %p132 = scmp.ne.s32.totalorder %s120, %s121
      %p133 = scmp.eq.s32.totalorder %s24, 5
      %p134 = por %p132, %p133
      %p136 = scmp.ne.s32.totalorder %s121, %s135
      %p137 = scmp.eq.s32.totalorder %s24, 0
      %p138 = por %p136, %p137
      %s140 = sadd.s32 %s139, 1
      %p143 = scmp.eq.s32.totalorder %s18, 5
      %p144 = scmp.ne.s32.totalorder %s139, %s141
      %p145 = scmp.eq.s32.totalorder %s18, 0
      %p146 = por %p144, %p145
      %p147 = scmp.ne.s32.totalorder %s139, %s141
      %p148 = scmp.eq.s32.totalorder %s23, 5
      %p149 = por %p147, %p148
      %p150 = scmp.ne.s32.totalorder %s141, %s142
      %p151 = scmp.eq.s32.totalorder %s23, 0
      %p152 = por %p150, %p151
      %p153 = scmp.ne.s32.totalorder %s141, %s142
      %p154 = scmp.eq.s32.totalorder %s24, 5
      %p155 = por %p153, %p154
      %p157 = scmp.ne.s32.totalorder %s142, %s156
      %p158 = scmp.eq.s32.totalorder %s24, 0
      %p159 = por %p157, %p158
      %s160 = ssub.s32 %s25, %s37
      %p161 = scmp.eq.s32.totalorder %s160, 0
      %s163 = sadd.s32 %s162, 1
      %s164 = scalar_select %p161, %s162, %s163
      %p167 = pneg %p161
      %p168 = scmp.eq.s32.totalorder %s18, 5
      %p169 = por %p167, %p168
      %p170 = scmp.ne.s32.totalorder %s162, %s165
      %p171 = scmp.eq.s32.totalorder %s18, 0
      %p172 = por %p170, %p171
      %p173 = scmp.ne.s32.totalorder %s162, %s165
      %p174 = scmp.eq.s32.totalorder %s23, 5
      %p175 = por %p173, %p174
      %p176 = scmp.ne.s32.totalorder %s165, %s166
      %p177 = scmp.eq.s32.totalorder %s23, 0
      %p178 = por %p176, %p177
      %p179 = scmp.ne.s32.totalorder %s165, %s166
      %p180 = scmp.eq.s32.totalorder %s24, 5
      %p181 = por %p179, %p180
      %p183 = scmp.ne.s32.totalorder %s166, %s182
      %p184 = scmp.eq.s32.totalorder %s24, 0
      %p185 = por %p183, %p184
      %p186 = scmp.le.s32.totalorder 1, %s18
      %p187 = scmp.lt.s32.totalorder %s18, 7
      %p188 = pnand %p186, %p187
      %p189 = pneg %p188
      // Predicated region
      $region9: #{tpu_custom_call.1} parent=5 // pred_check
        _
      $region10: #{tpu_custom_call.1} parent=5 // pred_check_branch
        %191 = sbr.rel (%p188) target = $region12
      $region11: #{tpu_custom_call.1} parent=5 // pred_region
        %s192 = ssub.s32 %s18, 1
        // Predicated region
        $region13: #{tpu_custom_call.1} parent=11 // pred_check
          %p193 = pneg %p131
        $region14: #{tpu_custom_call.1} parent=11 // pred_check_branch
          %195 = sbr.rel (%p193) target = $region16
        $region15: #{tpu_custom_call.1} parent=11 // pred_region
          %s197 = ssub.s32 2048, 2048
          %198 = vsyncadd [#allocation8], %s197
          %s199 = sshll.u32 [#allocation7], 4
          %s200 = int_to_ptr.vmem [resolvable:$true] %s199
          %205 = dma.hbm_to_vmem [thread:$0]  %s3, 2048, %s200, [#allocation8], 128, 128, 8
        $region16: #{tpu_custom_call.1} parent=11 // pred_fallthru
          _
        // Predicated region
        $region17: #{tpu_custom_call.1} parent=11 // pred_check
          %p206 = pneg %p152
        $region18: #{tpu_custom_call.1} parent=11 // pred_check_branch
          %208 = sbr.rel (%p206) target = $region20
        $region19: #{tpu_custom_call.1} parent=11 // pred_region
          _
        $region20: #{tpu_custom_call.1} parent=11 // pred_fallthru
          _
      $region12: #{tpu_custom_call.1} parent=5 // pred_fallthru
        _
      %p209 = scmp.lt.s32.totalorder %s18, 6
      // Predicated region
      $region21: #{tpu_custom_call.1} parent=5 // pred_check
        %p210 = pneg %p209
      $region22: #{tpu_custom_call.1} parent=5 // pred_check_branch
        %212 = sbr.rel (%p210) target = $region24
      $region23: #{tpu_custom_call.1} parent=5 // pred_region
        // Predicated region
        $region25: #{tpu_custom_call.1} parent=23 // pred_check
          %p213 = pneg %p52
        $region26: #{tpu_custom_call.1} parent=23 // pred_check_branch
          %215 = sbr.rel (%p213) target = $region28
        $region27: #{tpu_custom_call.1} parent=23 // pred_region
          %s216 = sand.u32 %s42, 1
          %s217 = sand.u32 %s42, 1
          %s218 = smul.addr %s217, 32
          %s219 = scalar_lea.vmem [#allocation3], %s218
          %s220 = smul.u32 8, %s25
          %s221 = smul.addr %s220, 2
          %s222 = sadd.s32 %s26, %s221
          %s223 = smul.addr %s222, 4
          %s224 = scalar_lea.vmem %s0, %s223
          // Predicated region
          $region29: #{tpu_custom_call.1} parent=27 // pred_check
            _
          $region30: #{tpu_custom_call.1} parent=27 // pred_check_branch
            %226 = sbr.rel (0) target = $region32
          $region31: #{tpu_custom_call.1} parent=27 // pred_region
            // Predicated region
            $region33: #{tpu_custom_call.1} parent=31 // pred_check
              _
            $region34: #{tpu_custom_call.1} parent=31 // pred_check_branch
              %228 = sbr.rel target = $region36
            $region35: #{tpu_custom_call.1} parent=31 // pred_region
              // Predicated region
              $region48: #{tpu_custom_call.1} parent=35 // pred_check
                _
              $region49: #{tpu_custom_call.1} parent=35 // pred_check_branch
                %257 = sbr.rel (0) target = $region51
              $region50: #{tpu_custom_call.1} parent=35 // pred_region
                loop: start=0, step=1, limit=1
                $region52: #{tpu_custom_call.1} parent=50 // loop_pre_header
                  _
                $region53: #{tpu_custom_call.1} parent=50 // loop_header
                  %s259 = sphi 0, %s263
                  %p260 = scmp.ge.s32.totalorder %s259, 1
                  %s264 = sphi %s224, %s224
                  %s265 = sphi %s219, %s219
                $region54: #{tpu_custom_call.1} parent=50 // loop_header_branch
                  %262 = sbr.rel (%p260) target = $region58
                $region55: #{tpu_custom_call.1} parent=50 // loop_body
                  _
                $region56: #{tpu_custom_call.1} parent=50 // loop_footer
                  %s263 = sadd.s32 1, %s259
                $region57: #{tpu_custom_call.1} parent=50 // loop_footer_branch
                  %258 = sbr.rel target = $region53
                $region58: #{tpu_custom_call.1} parent=50 // loop_exit
                  _
                loop: start=0, step=1, limit=1
                $region59: #{tpu_custom_call.1} parent=50 // loop_pre_header
                  _
                $region60: #{tpu_custom_call.1} parent=50 // loop_header
                  %s268 = sphi 0, %s272
                  %p269 = scmp.ge.s32.totalorder %s268, 1
                  %s273 = sphi %s224, %s224
                  %s274 = sphi %s219, %s219
                $region61: #{tpu_custom_call.1} parent=50 // loop_header_branch
                  %271 = sbr.rel (%p269) target = $region65
                $region62: #{tpu_custom_call.1} parent=50 // loop_body
                  %v275 = vld [vmem:[%s273] sm:$0xf]
                  %276 = vst [vmem:[%s274] sm:$0xf] %v275
                  %v277 = vld [vmem:[%s273 + $0x8] sm:$0xf]
                  %278 = vst [vmem:[%s274 + $0x4] sm:$0xf] %v277
                  %v279 = vld [vmem:[%s273 + $0x10] sm:$0xf]
                  %280 = vst [vmem:[%s274 + $0x8] sm:$0xf] %v279
                  %v281 = vld [vmem:[%s273 + $0x18] sm:$0xf]
                  %282 = vst [vmem:[%s274 + $0xc] sm:$0xf] %v281
                  %v283 = vld [vmem:[%s273 + $0x20] sm:$0xf]
                  %284 = vst [vmem:[%s274 + $0x10] sm:$0xf] %v283
                  %v285 = vld [vmem:[%s273 + $0x28] sm:$0xf]
                  %286 = vst [vmem:[%s274 + $0x14] sm:$0xf] %v285
                  %v287 = vld [vmem:[%s273 + $0x30] sm:$0xf]
                  %288 = vst [vmem:[%s274 + $0x18] sm:$0xf] %v287
                  %v289 = vld [vmem:[%s273 + $0x38] sm:$0xf]
                  %290 = vst [vmem:[%s274 + $0x1c] sm:$0xf] %v289
                $region63: #{tpu_custom_call.1} parent=50 // loop_footer
                  %s272 = sadd.s32 1, %s268
                $region64: #{tpu_custom_call.1} parent=50 // loop_footer_branch
                  %267 = sbr.rel target = $region60
                $region65: #{tpu_custom_call.1} parent=50 // loop_exit
                  _
              $region51: #{tpu_custom_call.1} parent=35 // pred_fallthru
                _
            $region36: #{tpu_custom_call.1} parent=31 // pred_fallthru
              _
            // Predicated region
            $region37: #{tpu_custom_call.1} parent=31 // pred_check
              _
            $region38: #{tpu_custom_call.1} parent=31 // pred_check_branch
              %230 = sbr.rel (0) target = $region40
            $region39: #{tpu_custom_call.1} parent=31 // pred_region
              loop: start=0, step=1, limit=1
              $region41: #{tpu_custom_call.1} parent=39 // loop_pre_header
                _
              $region42: #{tpu_custom_call.1} parent=39 // loop_header
                %s233 = sphi 0, %s237
                %p234 = scmp.ge.s32.totalorder %s233, 1
                %s238 = sphi %s224, %s224
                %s239 = sphi %s219, %s219
              $region43: #{tpu_custom_call.1} parent=39 // loop_header_branch
                %236 = sbr.rel (%p234) target = $region47
              $region44: #{tpu_custom_call.1} parent=39 // loop_body
                %v240 = vld [vmem:[%s238] sm:$0xf]
                %241 = vst [vmem:[%s239] sm:$0xf] %v240
                %v242 = vld [vmem:[%s238 + $0x8] sm:$0xf]
                %243 = vst [vmem:[%s239 + $0x4] sm:$0xf] %v242
                %v244 = vld [vmem:[%s238 + $0x10] sm:$0xf]
                %245 = vst [vmem:[%s239 + $0x8] sm:$0xf] %v244
                %v246 = vld [vmem:[%s238 + $0x18] sm:$0xf]
                %247 = vst [vmem:[%s239 + $0xc] sm:$0xf] %v246
                %v248 = vld [vmem:[%s238 + $0x20] sm:$0xf]
                %249 = vst [vmem:[%s239 + $0x10] sm:$0xf] %v248
                %v250 = vld [vmem:[%s238 + $0x28] sm:$0xf]
                %251 = vst [vmem:[%s239 + $0x14] sm:$0xf] %v250
                %v252 = vld [vmem:[%s238 + $0x30] sm:$0xf]
                %253 = vst [vmem:[%s239 + $0x18] sm:$0xf] %v252
                %v254 = vld [vmem:[%s238 + $0x38] sm:$0xf]
                %255 = vst [vmem:[%s239 + $0x1c] sm:$0xf] %v254
              $region45: #{tpu_custom_call.1} parent=39 // loop_footer
                %s237 = sadd.s32 1, %s233
              $region46: #{tpu_custom_call.1} parent=39 // loop_footer_branch
                %232 = sbr.rel target = $region42
              $region47: #{tpu_custom_call.1} parent=39 // loop_exit
                _
            $region40: #{tpu_custom_call.1} parent=31 // pred_fallthru
              _
          $region32: #{tpu_custom_call.1} parent=27 // pred_fallthru
            _
          %291 = vnop
        $region28: #{tpu_custom_call.1} parent=23 // pred_fallthru
          _
        // Predicated region
        $region66: #{tpu_custom_call.1} parent=23 // pred_check
          %p292 = pneg %p78
        $region67: #{tpu_custom_call.1} parent=23 // pred_check_branch
          %294 = sbr.rel (%p292) target = $region69
        $region68: #{tpu_custom_call.1} parent=23 // pred_region
          %s295 = sand.u32 %s68, 1
          %s296 = scalar_lea.sflag [#allocation5], %s295
          %s297 = sand.u32 %s68, 1
          %s298 = smul.addr %s297, 128
          %s299 = scalar_lea.vmem [#allocation4], %s298
          %s300 = smul.u32 16, %s26
          %s302 = ssub.s32 2048, 2048
          %303 = vsyncadd %s296, %s302
          %s304 = smul.addr %s300, 128
          %s305 = scalar_lea.hbm %s1, %s304
          %s306 = sshll.u32 %s299, 4
          %s307 = int_to_ptr.vmem [resolvable:$true] %s306
          %312 = dma.hbm_to_vmem [thread:$0]  %s305, 2048, %s307, %s296, 128, 128, 8
        $region69: #{tpu_custom_call.1} parent=23 // pred_fallthru
          _
        // Predicated region
        $region70: #{tpu_custom_call.1} parent=23 // pred_check
          %p313 = pneg %p104
        $region71: #{tpu_custom_call.1} parent=23 // pred_check_branch
          %315 = sbr.rel (%p313) target = $region73
        $region72: #{tpu_custom_call.1} parent=23 // pred_region
          %s316 = smul.u32 8, %s25
          %p317 = scmp.lt.s32.totalorder %s316, 23
          %s318 = scalar_select %p317, %s316, 23
          %s319 = smul.addr %s318, 8
          %s320 = scalar_lea.vmem %s2, %s319
          %s321 = smul.u32 8, %s25
        $region73: #{tpu_custom_call.1} parent=23 // pred_fallthru
          _
      $region24: #{tpu_custom_call.1} parent=5 // pred_fallthru
        _
      %p322 = scmp.le.s32.totalorder 1, %s18
      %p323 = scmp.lt.s32.totalorder %s18, 7
      %p324 = pnand %p322, %p323
      %p325 = pneg %p324
      // Predicated region
      $region74: #{tpu_custom_call.1} parent=5 // pred_check
        _
      $region75: #{tpu_custom_call.1} parent=5 // pred_check_branch
        %327 = sbr.rel (%p324) target = $region77
      $region76: #{tpu_custom_call.1} parent=5 // pred_region
        %s328 = ssub.s32 %s18, 1
        %s329 = sand.u32 %s45, 1
        %s330 = sand.u32 %s45, 1
        %s331 = smul.addr %s330, 32
        %s332 = scalar_lea.vmem [#allocation3], %s331
        // Predicated region
        $region78: #{tpu_custom_call.1} parent=76 // pred_check
          %p333 = pneg %p58
        $region79: #{tpu_custom_call.1} parent=76 // pred_check_branch
          %335 = sbr.rel (%p333) target = $region81
        $region80: #{tpu_custom_call.1} parent=76 // pred_region
          _
        $region81: #{tpu_custom_call.1} parent=76 // pred_fallthru
          _
        %s336 = sand.u32 %s71, 1
        %s337 = scalar_lea.sflag [#allocation5], %s336
        %s338 = sand.u32 %s71, 1
        %s339 = smul.addr %s338, 128
        %s340 = scalar_lea.vmem [#allocation4], %s339
        // Predicated region
        $region82: #{tpu_custom_call.1} parent=76 // pred_check
          %p341 = pneg %p84
        $region83: #{tpu_custom_call.1} parent=76 // pred_check_branch
          %343 = sbr.rel (%p341) target = $region85
        $region84: #{tpu_custom_call.1} parent=76 // pred_region
          %344 = dma.done %s337, 2048
        $region85: #{tpu_custom_call.1} parent=76 // pred_fallthru
          _
        // Predicated region
        $region86: #{tpu_custom_call.1} parent=76 // pred_check
          %p345 = pneg %p131
        $region87: #{tpu_custom_call.1} parent=76 // pred_check_branch
          %347 = sbr.rel (%p345) target = $region89
        $region88: #{tpu_custom_call.1} parent=76 // pred_region
          %348 = dma.done [#allocation8], 2048
        $region89: #{tpu_custom_call.1} parent=76 // pred_fallthru
          _
        %s349 = sand.u32 %s45, 1
        %s350 = sand.u32 %s45, 1
        %s351 = smul.addr %s350, 32
        %s352 = scalar_lea.vmem [#allocation3], %s351
        %p353 = pneg %p58
        %p354 = pneg %p55
        %s355 = sand.u32 %s71, 1
        %s356 = scalar_lea.sflag [#allocation5], %s355
        %s357 = sand.u32 %s71, 1
        %s358 = smul.addr %s357, 128
        %s359 = scalar_lea.vmem [#allocation4], %s358
        %p360 = pneg %p84
        %p361 = pneg %p81
        %s362 = smul.u32 8, %s27
        %p363 = scmp.lt.s32.totalorder %s362, 23
        %s364 = scalar_select %p363, %s362, 23
        %s365 = smul.addr %s364, 8
        %s366 = scalar_lea.vmem %s2, %s365
        %p367 = pneg %p110
        %p368 = pneg %p107
        %p369 = pneg %p131
        %p370 = pneg %p128
        %p371 = pneg %p152
        %p372 = pneg %p149
        %p373 = pneg %p178
        %p374 = pneg %p175
        %s375 = sand.u32 %s165, 1
        %s376 = scalar_lea.sflag [#allocation6], %s375
        %s377 = sand.u32 %s165, 1
        %s378 = smul.addr %s377, 64
        %s379 = scalar_lea.vmem [#allocation9], %s378
        %s380 = smul.u32 8, %s27
        %s381 = smul.u32 16, %s28
        %s382 = smul.u32 8, %s27
        %p383 = scmp.lt.s32.totalorder %s382, 23
        %s384 = scalar_select %p383, %s382, 23
        %s385 = smul.addr %s384, 8
        %s386 = scalar_lea.vmem %s2, %s385
        %s387 = smul.u32 8, %s27
        %s388 = smul.u32 8, %s27
        %p389 = scmp.eq.s32.totalorder %s28, 0
        // Predicated region
        $region90: #{tpu_custom_call.1} parent=76 // pred_check
          %p390 = pneg %p389
        $region91: #{tpu_custom_call.1} parent=76 // pred_check_branch
          %392 = sbr.rel (%p390) target = $region93
        $region92: #{tpu_custom_call.1} parent=76 // pred_region
          %393 = vst [vmem:[#allocation2] sm:$0xff] 0.0
          %394 = vst [vmem:[#allocation2 + $0x8] sm:$0xff] 0.0
          %395 = vst [vmem:[#allocation2 + $0x10] sm:$0xff] 0.0
          %396 = vst [vmem:[#allocation2 + $0x18] sm:$0xff] 0.0
          %397 = vst [vmem:[#allocation2 + $0x20] sm:$0xff] 0.0
          %398 = vst [vmem:[#allocation2 + $0x28] sm:$0xff] 0.0
          %399 = vst [vmem:[#allocation2 + $0x30] sm:$0xff] 0.0
          %400 = vst [vmem:[#allocation2 + $0x38] sm:$0xff] 0.0
        $region93: #{tpu_custom_call.1} parent=76 // pred_fallthru
          _
        %v401 = vld [vmem:[%s332] sm:$0xf]
        %v402 = vld [vmem:[%s332 + $0x4] sm:$0xf]
        %v403 = vld [vmem:[%s332 + $0x8] sm:$0xf]
        %v404 = vld [vmem:[%s332 + $0xc] sm:$0xf]
        %v405 = vld [vmem:[%s332 + $0x10] sm:$0xf]
        %v406 = vld [vmem:[%s332 + $0x14] sm:$0xf]
        %v407 = vld [vmem:[%s332 + $0x18] sm:$0xf]
        %v408 = vld [vmem:[%s332 + $0x1c] sm:$0xf]
        %v409 = vunpack.c.l.bf16 %v401
        %v410 = vunpack.c.l.bf16 %v402
        %v411 = vunpack.c.l.bf16 %v403
        %v412 = vunpack.c.l.bf16 %v404
        %v413 = vunpack.c.l.bf16 %v405
        %v414 = vunpack.c.l.bf16 %v406
        %v415 = vunpack.c.l.bf16 %v407
        %v416 = vunpack.c.l.bf16 %v408
        %v417 = vld [vmem:[#allocation2] sm:$0xff]
        %v418 = vld [vmem:[#allocation2 + $0x8] sm:$0xff]
        %v419 = vld [vmem:[#allocation2 + $0x10] sm:$0xff]
        %v420 = vld [vmem:[#allocation2 + $0x18] sm:$0xff]
        %v421 = vld [vmem:[#allocation2 + $0x20] sm:$0xff]
        %v422 = vld [vmem:[#allocation2 + $0x28] sm:$0xff]
        %v423 = vld [vmem:[#allocation2 + $0x30] sm:$0xff]
        %v424 = vld [vmem:[#allocation2 + $0x38] sm:$0xff]
        %v425 = vld [vmem:[%s340] sm:$0xff]
        %v426 = vld [vmem:[%s340 + $0x8] sm:$0xff]
        %v427 = vld [vmem:[%s340 + $0x10] sm:$0xff]
        %v428 = vld [vmem:[%s340 + $0x18] sm:$0xff]
        %v429 = vld [vmem:[%s340 + $0x20] sm:$0xff]
        %v430 = vld [vmem:[%s340 + $0x28] sm:$0xff]
        %v431 = vld [vmem:[%s340 + $0x30] sm:$0xff]
        %v432 = vld [vmem:[%s340 + $0x38] sm:$0xff]
        %v433 = vld [vmem:[%s340 + $0x40] sm:$0xff]
        %v434 = vld [vmem:[%s340 + $0x48] sm:$0xff]
        %v435 = vld [vmem:[%s340 + $0x50] sm:$0xff]
        %v436 = vld [vmem:[%s340 + $0x58] sm:$0xff]
        %v437 = vld [vmem:[%s340 + $0x60] sm:$0xff]
        %v438 = vld [vmem:[%s340 + $0x68] sm:$0xff]
        %v439 = vld [vmem:[%s340 + $0x70] sm:$0xff]
        %v440 = vld [vmem:[%s340 + $0x78] sm:$0xff]
        %441 = vmatprep.subr.mxu0 0.0
        %442 = vmatpush1.msra.mxu0 %v425
        %443 = vmatprep.subr.mxu0 0.0
        %444 = vmatpush1.msra.mxu0 %v426
        %445 = vmatprep.subr.mxu0 0.0
        %446 = vmatpush1.msra.mxu0 %v427
        %447 = vmatprep.subr.mxu0 0.0
        %448 = vmatpush1.msra.mxu0 %v428
        %449 = vmatprep.subr.mxu0 0.0
        %450 = vmatpush1.msra.mxu0 %v429
        %451 = vmatprep.subr.mxu0 0.0
        %452 = vmatpush1.msra.mxu0 %v430
        %453 = vmatprep.subr.mxu0 0.0
        %454 = vmatpush1.msra.mxu0 %v431
        %455 = vmatprep.subr.mxu0 0.0
        %456 = vmatpush1.msra.mxu0 %v432
        %457 = vmatprep.subr.mxu0 0.0
        %458 = vmatpush1.msra.mxu0 %v433
        %459 = vmatprep.subr.mxu0 0.0
        %460 = vmatpush1.msra.mxu0 %v434
        %461 = vmatprep.subr.mxu0 0.0
        %462 = vmatpush1.msra.mxu0 %v435
        %463 = vmatprep.subr.mxu0 0.0
        %464 = vmatpush1.msra.mxu0 %v436
        %465 = vmatprep.subr.mxu0 0.0
        %466 = vmatpush1.msra.mxu0 %v437
        %467 = vmatprep.subr.mxu0 0.0
        %468 = vmatpush1.msra.mxu0 %v438
        %469 = vmatprep.subr.mxu0 0.0
        %470 = vmatpush1.msra.mxu0 %v439
        %471 = vmatprep.subr.mxu0 0.0
        %472 = vmatpush1.msra.mxu0 %v440
        %473 = vmatprep.subr.mxu0 0.0
        %474 = vmatpush1.msra.mxu0 0.0
        %475 = vmatprep.subr.mxu0 0.0
        %476 = vmatpush1.msra.mxu0 0.0
        %477 = vmatprep.subr.mxu0 0.0
        %478 = vmatpush1.msra.mxu0 0.0
        %479 = vmatprep.subr.mxu0 0.0
        %480 = vmatpush1.msra.mxu0 0.0
        %481 = vmatprep.subr.mxu0 0.0
        %482 = vmatpush1.msra.mxu0 0.0
        %483 = vmatprep.subr.mxu0 0.0
        %484 = vmatpush1.msra.mxu0 0.0
        %485 = vmatprep.subr.mxu0 0.0
        %486 = vmatpush1.msra.mxu0 0.0
        %487 = vmatprep.subr.mxu0 0.0
        %488 = vmatpush1.msra.mxu0 0.0
        %489 = vmatprep.subr.mxu0 0.0
        %490 = vmatpush1.msra.mxu0 0.0
        %491 = vmatprep.subr.mxu0 0.0
        %492 = vmatpush1.msra.mxu0 0.0
        %493 = vmatprep.subr.mxu0 0.0
        %494 = vmatpush1.msra.mxu0 0.0
        %495 = vmatprep.subr.mxu0 0.0
        %496 = vmatpush1.msra.mxu0 0.0
        %497 = vmatprep.subr.mxu0 0.0
        %498 = vmatpush1.msra.mxu0 0.0
        %499 = vmatprep.subr.mxu0 0.0
        %500 = vmatpush1.msra.mxu0 0.0
        %501 = vmatprep.subr.mxu0 0.0
        %502 = vmatpush1.msra.mxu0 0.0
        %503 = vmatprep.subr.mxu0 0.0
        %504 = vmatpush1.msra.mxu0 0.0
        %505 = vmatprep.mubr.f32.mxu0 0.0
        %506 = vmatmul.mubr.f32.gmra.mrb[0].mxu0 %v409
        %v507 = vpop.f32.mrb[0].mxu0
        %v508 = vadd.f32 0.0, %v507
        %v509 = vpop.f32.mrb[0].mxu0
        %510 = vmatprep.mubr.f32.mxu0 0.0
        %511 = vmatmul.mubr.f32.gmra.mrb[0].mxu0 %v410
        %v512 = vpop.f32.mrb[0].mxu0
        %v513 = vadd.f32 0.0, %v512
        %v514 = vpop.f32.mrb[0].mxu0
        %515 = vmatprep.mubr.f32.mxu0 0.0
        %516 = vmatmul.mubr.f32.gmra.mrb[0].mxu0 %v411
        %v517 = vpop.f32.mrb[0].mxu0
        %v518 = vadd.f32 0.0, %v517
        %v519 = vpop.f32.mrb[0].mxu0
        %520 = vmatprep.mubr.f32.mxu0 0.0
        %521 = vmatmul.mubr.f32.gmra.mrb[0].mxu0 %v412
        %v522 = vpop.f32.mrb[0].mxu0
        %v523 = vadd.f32 0.0, %v522
        %v524 = vpop.f32.mrb[0].mxu0
        %525 = vmatprep.mubr.f32.mxu0 0.0
        %526 = vmatmul.mubr.f32.gmra.mrb[0].mxu0 %v413
        %v527 = vpop.f32.mrb[0].mxu0
        %v528 = vadd.f32 0.0, %v527
        %v529 = vpop.f32.mrb[0].mxu0
        %530 = vmatprep.mubr.f32.mxu0 0.0
        %531 = vmatmul.mubr.f32.gmra.mrb[0].mxu0 %v414
        %v532 = vpop.f32.mrb[0].mxu0
        %v533 = vadd.f32 0.0, %v532
        %v534 = vpop.f32.mrb[0].mxu0
        %535 = vmatprep.mubr.f32.mxu0 0.0
        %536 = vmatmul.mubr.f32.gmra.mrb[0].mxu0 %v415
        %v537 = vpop.f32.mrb[0].mxu0
        %v538 = vadd.f32 0.0, %v537
        %v539 = vpop.f32.mrb[0].mxu0
        %540 = vmatprep.mubr.f32.mxu0 0.0
        %541 = vmatmul.mubr.f32.gmra.mrb[0].mxu0 %v416
        %v542 = vpop.f32.mrb[0].mxu0
        %v543 = vadd.f32 0.0, %v542
        %v544 = vpop.f32.mrb[0].mxu0
        %545 = vdwg.mxu0
        %v546 = vadd.f32 %v417, %v508
        %v547 = vadd.f32 %v418, %v513
        %v548 = vadd.f32 %v419, %v518
        %v549 = vadd.f32 %v420, %v523
        %v550 = vadd.f32 %v421, %v528
        %v551 = vadd.f32 %v422, %v533
        %v552 = vadd.f32 %v423, %v538
        %v553 = vadd.f32 %v424, %v543
        %554 = vst [vmem:[#allocation2] sm:$0xff] %v546
        %555 = vst [vmem:[#allocation2 + $0x8] sm:$0xff] %v547
        %556 = vst [vmem:[#allocation2 + $0x10] sm:$0xff] %v548
        %557 = vst [vmem:[#allocation2 + $0x18] sm:$0xff] %v549
        %558 = vst [vmem:[#allocation2 + $0x20] sm:$0xff] %v550
        %559 = vst [vmem:[#allocation2 + $0x28] sm:$0xff] %v551
        %560 = vst [vmem:[#allocation2 + $0x30] sm:$0xff] %v552
        %561 = vst [vmem:[#allocation2 + $0x38] sm:$0xff] %v553
        %p562 = scmp.eq.s32.totalorder %s28, 1
        // Predicated region
        $region94: #{tpu_custom_call.1} parent=76 // pred_check
          %p563 = pneg %p562
        $region95: #{tpu_custom_call.1} parent=76 // pred_check_branch
          %565 = sbr.rel (%p563) target = $region97
        $region96: #{tpu_custom_call.1} parent=76 // pred_region
          %v566 = vld [vmem:[#allocation2] sm:$0xff]
          %v567 = vld [vmem:[#allocation2 + $0x8] sm:$0xff]
          %v568 = vld [vmem:[#allocation2 + $0x10] sm:$0xff]
          %v569 = vld [vmem:[#allocation2 + $0x18] sm:$0xff]
          %v570 = vld [vmem:[#allocation2 + $0x20] sm:$0xff]
          %v571 = vld [vmem:[#allocation2 + $0x28] sm:$0xff]
          %v572 = vld [vmem:[#allocation2 + $0x30] sm:$0xff]
          %v573 = vld [vmem:[#allocation2 + $0x38] sm:$0xff]
          %v574 = vld [vmem:[%s386] sm:$0xff]
          %v575 = vld [vmem:[%s386 + $0x8] sm:$0xff]
          %v576 = vld [vmem:[%s386 + $0x10] sm:$0xff]
          %v577 = vld [vmem:[%s386 + $0x18] sm:$0xff]
          %v578 = vld [vmem:[%s386 + $0x20] sm:$0xff]
          %v579 = vld [vmem:[%s386 + $0x28] sm:$0xff]
          %v580 = vld [vmem:[%s386 + $0x30] sm:$0xff]
          %v581 = vld [vmem:[%s386 + $0x38] sm:$0xff]
          %v582 = vmax.f32 %v574, 1.0
          %v583 = vmax.f32 %v575, 1.0
          %v584 = vmax.f32 %v576, 1.0
          %v585 = vmax.f32 %v577, 1.0
          %v586 = vmax.f32 %v578, 1.0
          %v587 = vmax.f32 %v579, 1.0
          %v588 = vmax.f32 %v580, 1.0
          %v589 = vmax.f32 %v581, 1.0
          %v590 = vrcp.pop %v582
          %v591 = vrcp.pop %v583
          %v592 = vrcp.pop %v584
          %v593 = vrcp.pop %v585
          %v594 = vrcp.pop %v586
          %v595 = vrcp.pop %v587
          %v596 = vrcp.pop %v588
          %v597 = vrcp.pop %v589
          %v598 = vmul.f32 %v582, %v590
          %v599 = vmul.f32 %v583, %v591
          %v600 = vmul.f32 %v584, %v592
          %v601 = vmul.f32 %v585, %v593
          %v602 = vmul.f32 %v586, %v594
          %v603 = vmul.f32 %v587, %v595
          %v604 = vmul.f32 %v588, %v596
          %v605 = vmul.f32 %v589, %v597
          %v606 = vsub.f32 2.0, %v598
          %v607 = vsub.f32 2.0, %v599
          %v608 = vsub.f32 2.0, %v600
          %v609 = vsub.f32 2.0, %v601
          %v610 = vsub.f32 2.0, %v602
          %v611 = vsub.f32 2.0, %v603
          %v612 = vsub.f32 2.0, %v604
          %v613 = vsub.f32 2.0, %v605
          %v614 = vmul.f32 %v590, %v606
          %v615 = vmul.f32 %v591, %v607
          %v616 = vmul.f32 %v592, %v608
          %v617 = vmul.f32 %v593, %v609
          %v618 = vmul.f32 %v594, %v610
          %v619 = vmul.f32 %v595, %v611
          %v620 = vmul.f32 %v596, %v612
          %v621 = vmul.f32 %v597, %v613
          %623 = vset.pattern.permute.xlu0 0
          %624 = vperm.xlu0 %623, %v614
          %v625 = vpop.permute.xlu0 %624
          %628 = vset.pattern.permute.xlu0 0
          %629 = vperm.xlu0 %628, %v615
          %v630 = vpop.permute.xlu0 %629
          %633 = vset.pattern.permute.xlu0 0
          %634 = vperm.xlu0 %633, %v616
          %v635 = vpop.permute.xlu0 %634
          %638 = vset.pattern.permute.xlu0 0
          %639 = vperm.xlu0 %638, %v617
          %v640 = vpop.permute.xlu0 %639
          %643 = vset.pattern.permute.xlu0 0
          %644 = vperm.xlu0 %643, %v618
          %v645 = vpop.permute.xlu0 %644
          %648 = vset.pattern.permute.xlu0 0
          %649 = vperm.xlu0 %648, %v619
          %v650 = vpop.permute.xlu0 %649
          %653 = vset.pattern.permute.xlu0 0
          %654 = vperm.xlu0 %653, %v620
          %v655 = vpop.permute.xlu0 %654
          %658 = vset.pattern.permute.xlu0 0
          %659 = vperm.xlu0 %658, %v621
          %v660 = vpop.permute.xlu0 %659
          %v662 = vmul.f32 %v566, %v625
          %v663 = vmul.f32 %v567, %v630
          %v664 = vmul.f32 %v568, %v635
          %v665 = vmul.f32 %v569, %v640
          %v666 = vmul.f32 %v570, %v645
          %v667 = vmul.f32 %v571, %v650
          %v668 = vmul.f32 %v572, %v655
          %v669 = vmul.f32 %v573, %v660
          %v670 = vld [vmem:[#allocation7] sm:$0xff]
          %v671 = vld [vmem:[#allocation7 + $0x8] sm:$0xff]
          %v672 = vld [vmem:[#allocation7 + $0x10] sm:$0xff]
          %v673 = vld [vmem:[#allocation7 + $0x18] sm:$0xff]
          %v674 = vld [vmem:[#allocation7 + $0x20] sm:$0xff]
          %v675 = vld [vmem:[#allocation7 + $0x28] sm:$0xff]
          %v676 = vld [vmem:[#allocation7 + $0x30] sm:$0xff]
          %v677 = vld [vmem:[#allocation7 + $0x38] sm:$0xff]
          %v678 = vld [vmem:[#allocation7 + $0x40] sm:$0xff]
          %v679 = vld [vmem:[#allocation7 + $0x48] sm:$0xff]
          %v680 = vld [vmem:[#allocation7 + $0x50] sm:$0xff]
          %v681 = vld [vmem:[#allocation7 + $0x58] sm:$0xff]
          %v682 = vld [vmem:[#allocation7 + $0x60] sm:$0xff]
          %v683 = vld [vmem:[#allocation7 + $0x68] sm:$0xff]
          %v684 = vld [vmem:[#allocation7 + $0x70] sm:$0xff]
          %v685 = vld [vmem:[#allocation7 + $0x78] sm:$0xff]
          %v686 = vld [vmem:[%s4] sm:$0x1]
          %v688 = vlaneseq
          %v689 = vshrl.u32 %v688, 7
          %v690 = vsub.s32 0, %v689
          %v691 = vrot.slane %v686, %v690
          %693 = vmatprep.subr.mxu0 0.0
          %694 = vmatpush1.msra.mxu0 %v670
          %695 = vmatprep.subr.mxu0 0.0
          %696 = vmatpush1.msra.mxu0 %v671
          %697 = vmatprep.subr.mxu0 0.0
          %698 = vmatpush1.msra.mxu0 %v672
          %699 = vmatprep.subr.mxu0 0.0
          %700 = vmatpush1.msra.mxu0 %v673
          %701 = vmatprep.subr.mxu0 0.0
          %702 = vmatpush1.msra.mxu0 %v674
          %703 = vmatprep.subr.mxu0 0.0
          %704 = vmatpush1.msra.mxu0 %v675
          %705 = vmatprep.subr.mxu0 0.0
          %706 = vmatpush1.msra.mxu0 %v676
          %707 = vmatprep.subr.mxu0 0.0
          %708 = vmatpush1.msra.mxu0 %v677
          %709 = vmatprep.subr.mxu0 0.0
          %710 = vmatpush1.msra.mxu0 %v678
          %711 = vmatprep.subr.mxu0 0.0
          %712 = vmatpush1.msra.mxu0 %v679
          %713 = vmatprep.subr.mxu0 0.0
          %714 = vmatpush1.msra.mxu0 %v680
          %715 = vmatprep.subr.mxu0 0.0
          %716 = vmatpush1.msra.mxu0 %v681
          %717 = vmatprep.subr.mxu0 0.0
          %718 = vmatpush1.msra.mxu0 %v682
          %719 = vmatprep.subr.mxu0 0.0
          %720 = vmatpush1.msra.mxu0 %v683
          %721 = vmatprep.subr.mxu0 0.0
          %722 = vmatpush1.msra.mxu0 %v684
          %723 = vmatprep.subr.mxu0 0.0
          %724 = vmatpush1.msra.mxu0 %v685
          %725 = vmatprep.subr.mxu0 0.0
          %726 = vmatpush1.msra.mxu0 0.0
          %727 = vmatprep.subr.mxu0 0.0
          %728 = vmatpush1.msra.mxu0 0.0
          %729 = vmatprep.subr.mxu0 0.0
          %730 = vmatpush1.msra.mxu0 0.0
          %731 = vmatprep.subr.mxu0 0.0
          %732 = vmatpush1.msra.mxu0 0.0
          %733 = vmatprep.subr.mxu0 0.0
          %734 = vmatpush1.msra.mxu0 0.0
          %735 = vmatprep.subr.mxu0 0.0
          %736 = vmatpush1.msra.mxu0 0.0
          %737 = vmatprep.subr.mxu0 0.0
          %738 = vmatpush1.msra.mxu0 0.0
          %739 = vmatprep.subr.mxu0 0.0
          %740 = vmatpush1.msra.mxu0 0.0
          %741 = vmatprep.subr.mxu0 0.0
          %742 = vmatpush1.msra.mxu0 0.0
          %743 = vmatprep.subr.mxu0 0.0
          %744 = vmatpush1.msra.mxu0 0.0
          %745 = vmatprep.subr.mxu0 0.0
          %746 = vmatpush1.msra.mxu0 0.0
          %747 = vmatprep.subr.mxu0 0.0
          %748 = vmatpush1.msra.mxu0 0.0
          %749 = vmatprep.subr.mxu0 0.0
          %750 = vmatpush1.msra.mxu0 0.0
          %751 = vmatprep.subr.mxu0 0.0
          %752 = vmatpush1.msra.mxu0 0.0
          %753 = vmatprep.subr.mxu0 0.0
          %754 = vmatpush1.msra.mxu0 0.0
          %755 = vmatprep.subr.mxu0 0.0
          %756 = vmatpush1.msra.mxu0 0.0
          %757 = vmatprep.mubr.f32.mxu0 0.0
          %758 = vmatmul.mubr.f32.gmra.mrb[0].mxu0 %v662
          %v759 = vpop.f32.mrb[0].mxu0
          %v760 = vadd.f32 %v691, %v759
          %v761 = vpop.f32.mrb[0].mxu0
          %762 = vmatprep.mubr.f32.mxu0 0.0
          %763 = vmatmul.mubr.f32.gmra.mrb[0].mxu0 %v663
          %v764 = vpop.f32.mrb[0].mxu0
          %v765 = vadd.f32 %v691, %v764
          %v766 = vpop.f32.mrb[0].mxu0
          %767 = vmatprep.mubr.f32.mxu0 0.0
          %768 = vmatmul.mubr.f32.gmra.mrb[0].mxu0 %v664
          %v769 = vpop.f32.mrb[0].mxu0
          %v770 = vadd.f32 %v691, %v769
          %v771 = vpop.f32.mrb[0].mxu0
          %772 = vmatprep.mubr.f32.mxu0 0.0
          %773 = vmatmul.mubr.f32.gmra.mrb[0].mxu0 %v665
          %v774 = vpop.f32.mrb[0].mxu0
          %v775 = vadd.f32 %v691, %v774
          %v776 = vpop.f32.mrb[0].mxu0
          %777 = vmatprep.mubr.f32.mxu0 0.0
          %778 = vmatmul.mubr.f32.gmra.mrb[0].mxu0 %v666
          %v779 = vpop.f32.mrb[0].mxu0
          %v780 = vadd.f32 %v691, %v779
          %v781 = vpop.f32.mrb[0].mxu0
          %782 = vmatprep.mubr.f32.mxu0 0.0
          %783 = vmatmul.mubr.f32.gmra.mrb[0].mxu0 %v667
          %v784 = vpop.f32.mrb[0].mxu0
          %v785 = vadd.f32 %v691, %v784
          %v786 = vpop.f32.mrb[0].mxu0
          %787 = vmatprep.mubr.f32.mxu0 0.0
          %788 = vmatmul.mubr.f32.gmra.mrb[0].mxu0 %v668
          %v789 = vpop.f32.mrb[0].mxu0
          %v790 = vadd.f32 %v691, %v789
          %v791 = vpop.f32.mrb[0].mxu0
          %792 = vmatprep.mubr.f32.mxu0 0.0
          %793 = vmatmul.mubr.f32.gmra.mrb[0].mxu0 %v669
          %v794 = vpop.f32.mrb[0].mxu0
          %v795 = vadd.f32 %v691, %v794
          %v796 = vpop.f32.mrb[0].mxu0
          %797 = vdwg.mxu0
          %vm798 = vcmp.gt.f32.partialorder %v760, 0.0
          %vm799 = vcmp.gt.f32.partialorder %v765, 0.0
          %vm800 = vcmp.gt.f32.partialorder %v770, 0.0
          %vm801 = vcmp.gt.f32.partialorder %v775, 0.0
          %vm802 = vcmp.gt.f32.partialorder %v780, 0.0
          %vm803 = vcmp.gt.f32.partialorder %v785, 0.0
          %vm804 = vcmp.gt.f32.partialorder %v790, 0.0
          %vm805 = vcmp.gt.f32.partialorder %v795, 0.0
          %v806 = vmin.f32 %v760, 0.0
          %v807 = vmin.f32 %v765, 0.0
          %v808 = vmin.f32 %v770, 0.0
          %v809 = vmin.f32 %v775, 0.0
          %v810 = vmin.f32 %v780, 0.0
          %v811 = vmin.f32 %v785, 0.0
          %v812 = vmin.f32 %v790, 0.0
          %v813 = vmin.f32 %v795, 0.0
          %v814 = vmul.f32 %v806, 1.442695
          %v815 = vpow.pop %v814
          %v816 = vmul.f32 %v807, 1.442695
          %v817 = vpow.pop %v816
          %v818 = vmul.f32 %v808, 1.442695
          %v819 = vpow.pop %v818
          %v820 = vmul.f32 %v809, 1.442695
          %v821 = vpow.pop %v820
          %v822 = vmul.f32 %v810, 1.442695
          %v823 = vpow.pop %v822
          %v824 = vmul.f32 %v811, 1.442695
          %v825 = vpow.pop %v824
          %v826 = vmul.f32 %v812, 1.442695
          %v827 = vpow.pop %v826
          %v828 = vmul.f32 %v813, 1.442695
          %v829 = vpow.pop %v828
          %v830 = vsub.f32 %v815, 1.0
          %v831 = vsub.f32 %v817, 1.0
          %v832 = vsub.f32 %v819, 1.0
          %v833 = vsub.f32 %v821, 1.0
          %v834 = vsub.f32 %v823, 1.0
          %v835 = vsub.f32 %v825, 1.0
          %v836 = vsub.f32 %v827, 1.0
          %v837 = vsub.f32 %v829, 1.0
          %v838 = vsel %vm798, %v760, %v830
          %v839 = vsel %vm799, %v765, %v831
          %v840 = vsel %vm800, %v770, %v832
          %v841 = vsel %vm801, %v775, %v833
          %v842 = vsel %vm802, %v780, %v834
          %v843 = vsel %vm803, %v785, %v835
          %v844 = vsel %vm804, %v790, %v836
          %v845 = vsel %vm805, %v795, %v837
          %846 = vst [vmem:[%s379] sm:$0xff] %v838
          %847 = vst [vmem:[%s379 + $0x8] sm:$0xff] %v839
          %848 = vst [vmem:[%s379 + $0x10] sm:$0xff] %v840
          %849 = vst [vmem:[%s379 + $0x18] sm:$0xff] %v841
          %850 = vst [vmem:[%s379 + $0x20] sm:$0xff] %v842
          %851 = vst [vmem:[%s379 + $0x28] sm:$0xff] %v843
          %852 = vst [vmem:[%s379 + $0x30] sm:$0xff] %v844
          %853 = vst [vmem:[%s379 + $0x38] sm:$0xff] %v845
        $region97: #{tpu_custom_call.1} parent=76 // pred_fallthru
          _
        %s854 = sand.u32 %s165, 1
        %s855 = scalar_lea.sflag [#allocation6], %s854
        %s856 = sand.u32 %s165, 1
        %s857 = smul.addr %s856, 64
        %s858 = scalar_lea.vmem [#allocation9], %s857
        // Predicated region
        $region98: #{tpu_custom_call.1} parent=76 // pred_check
          %p859 = pneg %p175
        $region99: #{tpu_custom_call.1} parent=76 // pred_check_branch
          %861 = sbr.rel (%p859) target = $region101
        $region100: #{tpu_custom_call.1} parent=76 // pred_region
          %s862 = smul.u32 8, %s27
          %s864 = ssub.s32 1024, 1024
          %865 = vsyncadd %s855, %s864
          %s866 = smul.addr %s862, 128
          %s867 = scalar_lea.hbm %s5, %s866
          %s868 = sshll.u32 %s858, 4
          %s869 = int_to_ptr.vmem [resolvable:$true] %s868
          %874 = dma.vmem_to_hbm [thread:$0]  %s869, 1024, %s867, %s855, 128, 128, 8
        $region101: #{tpu_custom_call.1} parent=76 // pred_fallthru
          _
      $region77: #{tpu_custom_call.1} parent=5 // pred_fallthru
        _
      %p875 = scmp.le.s32.totalorder 2, %s18
      // Predicated region
      $region102: #{tpu_custom_call.1} parent=5 // pred_check
        %p876 = pneg %p875
      $region103: #{tpu_custom_call.1} parent=5 // pred_check_branch
        %878 = sbr.rel (%p876) target = $region105
      $region104: #{tpu_custom_call.1} parent=5 // pred_region
        %s879 = ssub.s32 %s18, 2
        // Predicated region
        $region106: #{tpu_custom_call.1} parent=104 // pred_check
          %p880 = pneg %p181
        $region107: #{tpu_custom_call.1} parent=104 // pred_check_branch
          %882 = sbr.rel (%p880) target = $region109
        $region108: #{tpu_custom_call.1} parent=104 // pred_region
          %s883 = sand.u32 %s166, 1
          %s884 = scalar_lea.sflag [#allocation6], %s883
          %s885 = sand.u32 %s166, 1
          %s886 = smul.addr %s885, 64
          %s887 = scalar_lea.vmem [#allocation9], %s886
          %888 = dma.done %s884, 1024
        $region109: #{tpu_custom_call.1} parent=104 // pred_fallthru
          _
      $region105: #{tpu_custom_call.1} parent=5 // pred_fallthru
        _
    $region6: #{tpu_custom_call.1} parent=1 // loop_footer
      %s22 = sadd.s32 1, %s18
    $region7: #{tpu_custom_call.1} parent=1 // loop_footer_branch
      %17 = sbr.rel target = $region3
    $region8: #{tpu_custom_call.1} parent=1 // loop_exit
      _
    %889 = vsyncpa [#allocation5], 1
    %s890 = scalar_lea.sflag [#allocation5], 1
    %891 = vsyncpa %s890, 1
    %892 = vsyncpa [#allocation8], 1
    %893 = vsyncpa [#allocation6], 1
    %s894 = scalar_lea.sflag [#allocation6], 1
    %895 = vsyncpa %s894, 1

</llo_original>
